<compile_context>
chip_gen: v7x
topology: tpu7x:2x2x1
jax: 0.10.0
libtpu: 0.0.40
codegen_flags: <defaults>
</compile_context>

<pallas_src>
import jax
import jax.numpy as jnp
from jax.experimental import pallas as pl
from jax.experimental.pallas import tpu as pltpu

SENT_EMBED_DIM = 256
CONDITION = 100          # mu / logvar width
D_OUT = CONDITION * 4    # 400 = fc output width
LANE = 128               # vreg lane width; padded per-group width
D_PACKED = 4 * LANE      # 512 = packed fc output width


def ca_net_kernel(x_ref, w_ref, b_ref, eps_ref, out_ref):
    # Linear: [B, 256] bf16 @ [256, 512] bf16 -> [B, 512], f32 MXU accumulate.
    h = jnp.dot(x_ref[...], w_ref[...], preferred_element_type=jnp.float32)
    h = h + b_ref[...]                       # [1, 512] f32 bias, broadcasts over batch

    # GLU + reparametrization on 128-lane-aligned column groups (pure VPU/EUP,
    # zero cross-lane traffic).
    mu = h[:, 0 * LANE:1 * LANE] * jax.nn.sigmoid(h[:, 2 * LANE:3 * LANE])
    half_logvar = h[:, 1 * LANE:2 * LANE] * jax.nn.sigmoid(h[:, 3 * LANE:4 * LANE])
    std = jnp.exp(half_logvar)               # 0.5 already folded into packed params

    # Lane-dense [B, 128] store (padded lanes carry zeros).
    out_ref[...] = (eps_ref[...] * std + mu).astype(out_ref.dtype)


def pack_params(w, b):
    """Repack fc params w:[256,400], b:[400] into lane-aligned groups.

    Column groups (each padded 100 -> 128 with zeros):
      0: mu linear           w[:,   0:100]
      1: 0.5 * logvar linear w[:, 100:200]   (folds exp(0.5*logvar))
      2: mu gate             w[:, 200:300]
      3: logvar gate         w[:, 300:400]
    """
    b = b.reshape(1, D_OUT)
    pad = LANE - CONDITION

    def grp(arr, idx, scale=1.0):
        cols = arr[:, idx * CONDITION:(idx + 1) * CONDITION] * scale
        return jnp.pad(cols, ((0, 0), (0, pad)))

    w_packed = jnp.concatenate([grp(w, 0), grp(w, 1, 0.5), grp(w, 2), grp(w, 3)], axis=1)
    b_packed = jnp.concatenate([grp(b, 0), grp(b, 1, 0.5), grp(b, 2), grp(b, 3)], axis=1)
    return w_packed.astype(jnp.bfloat16), b_packed.astype(jnp.float32)


def ca_net_forward(sent_embedding, w_packed, b_packed, eps):
    B = sent_embedding.shape[0]
    eps_padded = jnp.pad(eps, ((0, 0), (0, LANE - CONDITION)))
    out_padded = pl.pallas_call(
        ca_net_kernel,
        out_shape=jax.ShapeDtypeStruct((B, LANE), jnp.float32),
        in_specs=[
            pl.BlockSpec(memory_space=pltpu.MemorySpace.VMEM),  # x   (bf16)
            pl.BlockSpec(memory_space=pltpu.MemorySpace.VMEM),  # W'  (bf16)
            pl.BlockSpec(memory_space=pltpu.MemorySpace.VMEM),  # b'  (f32)
            pl.BlockSpec(memory_space=pltpu.MemorySpace.VMEM),  # eps (f32, padded)
        ],
        out_specs=pl.BlockSpec(memory_space=pltpu.MemorySpace.VMEM),
    )(sent_embedding.astype(jnp.bfloat16), w_packed, b_packed, eps_padded)
    return out_padded[:, :CONDITION]


def reference_forward_packed(x, w_packed, b_packed, eps):
    """Same math as the kernel (bf16 operands, f32 accumulate) in plain JAX."""
    h = jnp.dot(x.astype(jnp.bfloat16), w_packed,
                preferred_element_type=jnp.float32) + b_packed
    mu = h[:, 0:LANE] * jax.nn.sigmoid(h[:, 2 * LANE:3 * LANE])
    std = jnp.exp(h[:, LANE:2 * LANE] * jax.nn.sigmoid(h[:, 3 * LANE:4 * LANE]))
    return eps * std[:, :CONDITION] + mu[:, :CONDITION]


def reference_forward_f32(x, w, b, eps):
    """Original PyTorch module math in f32."""
    h = x @ w + b.reshape(1, -1)
    nc = D_OUT // 2
    glu = h[:, :nc] * jax.nn.sigmoid(h[:, nc:])
    mu = glu[:, :CONDITION]
    logvar = glu[:, CONDITION:]
    return eps * jnp.exp(0.5 * logvar) + mu


if __name__ == "__main__":
    B = 8  # small batch

    key = jax.random.PRNGKey(0)
    k_x, k_w, k_b, k_eps = jax.random.split(key, 4)

    # Deterministic synthetic fc params (nn.Linear(256, 400)), stored as
    # [D_in, D_out] so the kernel computes x @ W + b.
    w = jax.random.normal(k_w, (SENT_EMBED_DIM, D_OUT), jnp.float32) * 0.02
    b = jax.random.normal(k_b, (D_OUT,), jnp.float32) * 0.01

    x = jax.random.normal(k_x, (B, SENT_EMBED_DIM), jnp.float32)
    # eps is supplied as a deterministic input (torch draws it on-device with
    # .normal_()); could instead be generated in-kernel with pltpu.prng_seed +
    # pltpu.stateful_normal if bit-parity with an external eps is not needed.
    eps = jax.random.normal(k_eps, (B, CONDITION), jnp.float32)

    w_packed, b_packed = pack_params(w, b)

    out = jax.jit(ca_net_forward)(x, w_packed, b_packed, eps)
    out = jax.block_until_ready(out)
    assert out.shape == (B, CONDITION)

    # Tight check: identical math (bf16 weights, f32 accumulate) in plain JAX.
    ref_packed = reference_forward_packed(x, w_packed, b_packed, eps)
    assert jnp.allclose(out, ref_packed, atol=1e-3, rtol=1e-3)

    # Module-semantics check against the pure-f32 reference (loose tolerance
    # only accounts for bf16 weight/activation quantization).
    ref_f32 = reference_forward_f32(x, w, b, eps)
    assert jnp.allclose(out, ref_f32, atol=3e-2, rtol=3e-2)

    print("KERNEL_OK")
</pallas_src>

<mosaic_0001>
module attributes {stable_mosaic.version = 11 : i64} {
  func.func @ca_net_kernel(%arg0: memref<8x256xbf16, #tpu.memory_space<vmem>>, %arg1: memref<256x512xbf16, #tpu.memory_space<vmem>>, %arg2: memref<1x512xf32, #tpu.memory_space<vmem>>, %arg3: memref<8x128xf32, #tpu.memory_space<vmem>>, %arg4: memref<8x128xf32, #tpu.memory_space<vmem>>) attributes {dimension_semantics = [], scalar_prefetch = 0 : i64, scratch_operands = 0 : i64, tpu.core_type = #tpu.core_type<tc>} {
    %c0 = arith.constant 0 : index
    %c0_0 = arith.constant 0 : index
    %0 = vector.load %arg0[%c0, %c0_0] : memref<8x256xbf16, #tpu.memory_space<vmem>>, vector<8x256xbf16>
    %c0_1 = arith.constant 0 : index
    %c0_2 = arith.constant 0 : index
    %1 = vector.load %arg1[%c0_1, %c0_2] : memref<256x512xbf16, #tpu.memory_space<vmem>>, vector<256x512xbf16>
    %cst = arith.constant dense<0.000000e+00> : vector<8x512xf32>
    %2 = tpu.matmul %0, %1, %cst {dimension_numbers = #tpu.dot_dimension_numbers<[1], [0], [0], [1], [0, 0, 1, 1], [], []>} : vector<8x256xbf16>, vector<256x512xbf16>, vector<8x512xf32> -> vector<8x512xf32>
    %c0_3 = arith.constant 0 : index
    %c0_4 = arith.constant 0 : index
    %3 = vector.load %arg2[%c0_3, %c0_4] : memref<1x512xf32, #tpu.memory_space<vmem>>, vector<1x512xf32>
    %4 = vector.broadcast %3 : vector<1x512xf32> to vector<8x512xf32>
    %5 = arith.addf %2, %4 : vector<8x512xf32>
    %6 = vector.extract_strided_slice %5 {offsets = [0, 0], sizes = [8, 128], strides = [1, 1]} : vector<8x512xf32> to vector<8x128xf32>
    %7 = vector.extract_strided_slice %5 {offsets = [0, 256], sizes = [8, 128], strides = [1, 1]} : vector<8x512xf32> to vector<8x128xf32>
    %8 = arith.negf %7 : vector<8x128xf32>
    %9 = math.exp %8 : vector<8x128xf32>
    %cst_5 = arith.constant 1.000000e+00 : f32
    %10 = vector.broadcast %cst_5 : f32 to vector<8x128xf32>
    %11 = arith.addf %10, %9 : vector<8x128xf32>
    %12 = arith.divf %10, %11 : vector<8x128xf32>
    %13 = arith.mulf %6, %12 : vector<8x128xf32>
    %14 = vector.extract_strided_slice %5 {offsets = [0, 128], sizes = [8, 128], strides = [1, 1]} : vector<8x512xf32> to vector<8x128xf32>
    %15 = vector.extract_strided_slice %5 {offsets = [0, 384], sizes = [8, 128], strides = [1, 1]} : vector<8x512xf32> to vector<8x128xf32>
    %16 = arith.negf %15 : vector<8x128xf32>
    %17 = math.exp %16 : vector<8x128xf32>
    %cst_6 = arith.constant 1.000000e+00 : f32
    %18 = vector.broadcast %cst_6 : f32 to vector<8x128xf32>
    %19 = arith.addf %18, %17 : vector<8x128xf32>
    %20 = arith.divf %18, %19 : vector<8x128xf32>
    %21 = arith.mulf %14, %20 : vector<8x128xf32>
    %22 = math.exp %21 : vector<8x128xf32>
    %c0_7 = arith.constant 0 : index
    %c0_8 = arith.constant 0 : index
    %23 = vector.load %arg3[%c0_7, %c0_8] : memref<8x128xf32, #tpu.memory_space<vmem>>, vector<8x128xf32>
    %24 = arith.mulf %23, %22 : vector<8x128xf32>
    %25 = arith.addf %24, %13 : vector<8x128xf32>
    %c0_9 = arith.constant 0 : index
    %c0_10 = arith.constant 0 : index
    %26 = vector.load %arg4[%c0_9, %c0_10] : memref<8x128xf32, #tpu.memory_space<vmem>>, vector<8x128xf32>
    tpu.vector_store %arg4[%c0_9, %c0_10], %25 {strides = array<i32>} : memref<8x128xf32, #tpu.memory_space<vmem>>, vector<8x128xf32>,
    return
  }
}

</mosaic_0001>

<llo_original>
// kernel: ca_net_forward.1
$region0: #{ca_net_forward.1}
  #allocation0 [shape = 'u32[]', space=smem, size = 0x4, offset = 0x4, fixed_abs, tag = 'smem constant byte address 0x4 - core index']
  #allocation1 [shape = 'u32[144,128]{1,0:T(1,128)}', space=vmem, size = 0x12000, scoped, tag = 'internal scratch']
  %s0 = inlined_call_operand.vmem [shape: bf16[8,256], index: 0, kind: input, shape index: {}]
  %s1 = inlined_call_operand.hbm [shape: bf16[256,512], index: 1, kind: input, shape index: {}]
  %s2 = inlined_call_operand.vmem [shape: f32[1,512], index: 2, kind: input, shape index: {}]
  %s3 = inlined_call_operand.vmem [shape: f32[8,128], index: 3, kind: input, shape index: {}]
  %s4 = inlined_call_operand.hbm [shape: f32[8,128], index: 4, kind: output, shape index: {}]
  %s5 = sld [smem:[#allocation0]]
  $region30: #{ca_net_forward.1} parent=0
    _
  %s7 = ssub.s32 1, %s5
  %s8 = scalar_select 0, %s7, %s5
  $region1: #{ca_net_forward.1} parent=0
    #allocation2 [shape = 'u8[262144]{0}', space=vmem, size = 0x40000, scoped, tag = 'input window, operand 1, single buffered']
    #allocation3 [shape = 's32[1]{0}', space=sflag, size = 0x4, scoped, tag = 'scoped memory for ca_net_forward.1']
    #allocation4 [shape = 's32[1]{0}', space=sflag, size = 0x4, scoped, tag = 'scoped memory for ca_net_forward.1']
    #allocation5 [shape = 'u8[4096]{0}', space=vmem, size = 0x1000, scoped, tag = 'output window, operand 0, single buffered']
    %9 = vsyncpa [#allocation3], 0
    %10 = vsyncpa [#allocation4], 0
    // Predicated region
    $region2: #{ca_net_forward.1} parent=1 // pred_check
      _
    $region3: #{ca_net_forward.1} parent=1 // pred_check_branch
      %12 = sbr.rel (0) target = $region5
    $region4: #{ca_net_forward.1} parent=1 // pred_region
      _
    $region5: #{ca_net_forward.1} parent=1 // pred_fallthru
      _
    // Predicated region
    $region6: #{ca_net_forward.1} parent=1 // pred_check
      _
    $region7: #{ca_net_forward.1} parent=1 // pred_check_branch
      %14 = sbr.rel (0) target = $region9
    $region8: #{ca_net_forward.1} parent=1 // pred_region
      %s16 = ssub.s32 8192, 8192
      %17 = vsyncadd [#allocation3], %s16
      %s18 = sshll.u32 [#allocation2], 4
      %s19 = int_to_ptr.vmem [resolvable:$true] %s18
      %24 = dma.hbm_to_vmem [thread:$0]  %s1, 8192, %s19, [#allocation3], 256, 256, 16
    $region9: #{ca_net_forward.1} parent=1 // pred_fallthru
      _
    // Predicated region
    $region10: #{ca_net_forward.1} parent=1 // pred_check
      _
    $region11: #{ca_net_forward.1} parent=1 // pred_check_branch
      %26 = sbr.rel (0) target = $region13
    $region12: #{ca_net_forward.1} parent=1 // pred_region
      _
    $region13: #{ca_net_forward.1} parent=1 // pred_fallthru
      _
    // Predicated region
    $region14: #{ca_net_forward.1} parent=1 // pred_check
      _
    $region15: #{ca_net_forward.1} parent=1 // pred_check_branch
      %28 = sbr.rel (0) target = $region17
    $region16: #{ca_net_forward.1} parent=1 // pred_region
      _
    $region17: #{ca_net_forward.1} parent=1 // pred_fallthru
      _
    // Predicated region
    $region18: #{ca_net_forward.1} parent=1 // pred_check
      _
    $region19: #{ca_net_forward.1} parent=1 // pred_check_branch
      %30 = sbr.rel (0) target = $region21
    $region20: #{ca_net_forward.1} parent=1 // pred_region
      %31 = dma.done [#allocation3], 8192
    $region21: #{ca_net_forward.1} parent=1 // pred_fallthru
      _
    %v32 = vld [vmem:[%s0] sm:$0xff]
    %v33 = vld [vmem:[#allocation2] sm:$0xff]
    %v34 = vld [vmem:[#allocation2 + $0x8] sm:$0xff]
    %v35 = vld [vmem:[#allocation2 + $0x10] sm:$0xff]
    %v36 = vld [vmem:[#allocation2 + $0x18] sm:$0xff]
    %v37 = vld [vmem:[#allocation2 + $0x20] sm:$0xff]
    %v38 = vld [vmem:[#allocation2 + $0x28] sm:$0xff]
    %v39 = vld [vmem:[#allocation2 + $0x30] sm:$0xff]
    %v40 = vld [vmem:[#allocation2 + $0x38] sm:$0xff]
    %v41 = vld [vmem:[#allocation2 + $0x40] sm:$0xff]
    %v42 = vld [vmem:[#allocation2 + $0x48] sm:$0xff]
    %v43 = vld [vmem:[#allocation2 + $0x50] sm:$0xff]
    %v44 = vld [vmem:[#allocation2 + $0x58] sm:$0xff]
    %v45 = vld [vmem:[#allocation2 + $0x60] sm:$0xff]
    %v46 = vld [vmem:[#allocation2 + $0x68] sm:$0xff]
    %v47 = vld [vmem:[#allocation2 + $0x70] sm:$0xff]
    %v48 = vld [vmem:[#allocation2 + $0x78] sm:$0xff]
    %v49 = vld [vmem:[#allocation2 + $0x80] sm:$0xff]
    %v50 = vld [vmem:[#allocation2 + $0x88] sm:$0xff]
    %v51 = vld [vmem:[#allocation2 + $0x90] sm:$0xff]
    %v52 = vld [vmem:[#allocation2 + $0x98] sm:$0xff]
    %v53 = vld [vmem:[#allocation2 + $0xa0] sm:$0xff]
    %v54 = vld [vmem:[#allocation2 + $0xa8] sm:$0xff]
    %v55 = vld [vmem:[#allocation2 + $0xb0] sm:$0xff]
    %v56 = vld [vmem:[#allocation2 + $0xb8] sm:$0xff]
    %v57 = vld [vmem:[#allocation2 + $0xc0] sm:$0xff]
    %v58 = vld [vmem:[#allocation2 + $0xc8] sm:$0xff]
    %v59 = vld [vmem:[#allocation2 + $0xd0] sm:$0xff]
    %v60 = vld [vmem:[#allocation2 + $0xd8] sm:$0xff]
    %v61 = vld [vmem:[#allocation2 + $0xe0] sm:$0xff]
    %v62 = vld [vmem:[#allocation2 + $0xe8] sm:$0xff]
    %v63 = vld [vmem:[#allocation2 + $0xf0] sm:$0xff]
    %v64 = vld [vmem:[#allocation2 + $0xf8] sm:$0xff]
    %v65 = vld [vmem:[#allocation2 + $0x100] sm:$0xff]
    %v66 = vld [vmem:[#allocation2 + $0x108] sm:$0xff]
    %v67 = vld [vmem:[#allocation2 + $0x110] sm:$0xff]
    %v68 = vld [vmem:[#allocation2 + $0x118] sm:$0xff]
    %v69 = vld [vmem:[#allocation2 + $0x120] sm:$0xff]
    %v70 = vld [vmem:[#allocation2 + $0x128] sm:$0xff]
    %v71 = vld [vmem:[#allocation2 + $0x130] sm:$0xff]
    %v72 = vld [vmem:[#allocation2 + $0x138] sm:$0xff]
    %v73 = vld [vmem:[#allocation2 + $0x140] sm:$0xff]
    %v74 = vld [vmem:[#allocation2 + $0x148] sm:$0xff]
    %v75 = vld [vmem:[#allocation2 + $0x150] sm:$0xff]
    %v76 = vld [vmem:[#allocation2 + $0x158] sm:$0xff]
    %v77 = vld [vmem:[#allocation2 + $0x160] sm:$0xff]
    %v78 = vld [vmem:[#allocation2 + $0x168] sm:$0xff]
    %v79 = vld [vmem:[#allocation2 + $0x170] sm:$0xff]
    %v80 = vld [vmem:[#allocation2 + $0x178] sm:$0xff]
    %v81 = vld [vmem:[#allocation2 + $0x180] sm:$0xff]
    %v82 = vld [vmem:[#allocation2 + $0x188] sm:$0xff]
    %v83 = vld [vmem:[#allocation2 + $0x190] sm:$0xff]
    %v84 = vld [vmem:[#allocation2 + $0x198] sm:$0xff]
    %v85 = vld [vmem:[#allocation2 + $0x1a0] sm:$0xff]
    %v86 = vld [vmem:[#allocation2 + $0x1a8] sm:$0xff]
    %v87 = vld [vmem:[#allocation2 + $0x1b0] sm:$0xff]
    %v88 = vld [vmem:[#allocation2 + $0x1b8] sm:$0xff]
    %v89 = vld [vmem:[#allocation2 + $0x1c0] sm:$0xff]
    %v90 = vld [vmem:[#allocation2 + $0x1c8] sm:$0xff]
    %v91 = vld [vmem:[#allocation2 + $0x1d0] sm:$0xff]
    %v92 = vld [vmem:[#allocation2 + $0x1d8] sm:$0xff]
    %v93 = vld [vmem:[#allocation2 + $0x1e0] sm:$0xff]
    %v94 = vld [vmem:[#allocation2 + $0x1e8] sm:$0xff]
    %v95 = vld [vmem:[#allocation2 + $0x1f0] sm:$0xff]
    %v96 = vld [vmem:[#allocation2 + $0x1f8] sm:$0xff]
    %v97 = vld [vmem:[%s2] sm:$0xf]
    %v99 = vlaneseq
    %v100 = vshrl.u32 %v99, 7
    %v101 = vsub.s32 0, %v100
    %v102 = vrot.slane %v97, %v101
    %v103 = vlaneseq
    %v104 = vshrl.u32 %v103, 7
    %v105 = vsub.s32 1, %v104
    %v106 = vrot.slane %v97, %v105
    %v107 = vlaneseq
    %v108 = vshrl.u32 %v107, 7
    %v109 = vsub.s32 2, %v108
    %v110 = vrot.slane %v97, %v109
    %v111 = vlaneseq
    %v112 = vshrl.u32 %v111, 7
    %v113 = vsub.s32 3, %v112
    %v114 = vrot.slane %v97, %v113
    %v120 = vunpack.c.l.b16 %v32
    %v121 = vunpack.c.h.b16 %v32
    %v122 = vpack.c.b16 %v120, %v120
    %v123 = vpack.c.b16 %v121, %v121
    %v190 = vunpack.c.l.b16 %v33
    %v191 = vunpack.c.h.b16 %v33
    %v192 = vunpack.c.l.b16 %v34
    %v193 = vunpack.c.h.b16 %v34
    %v194 = vunpack.c.l.b16 %v35
    %v195 = vunpack.c.h.b16 %v35
    %v196 = vunpack.c.l.b16 %v36
    %v197 = vunpack.c.h.b16 %v36
    %v198 = vunpack.c.l.b16 %v37
    %v199 = vunpack.c.h.b16 %v37
    %v200 = vunpack.c.l.b16 %v38
    %v201 = vunpack.c.h.b16 %v38
    %v202 = vunpack.c.l.b16 %v39
    %v203 = vunpack.c.h.b16 %v39
    %v204 = vunpack.c.l.b16 %v40
    %v205 = vunpack.c.h.b16 %v40
    %v206 = vunpack.c.l.b16 %v41
    %v207 = vunpack.c.h.b16 %v41
    %v208 = vunpack.c.l.b16 %v42
    %v209 = vunpack.c.h.b16 %v42
    %v210 = vunpack.c.l.b16 %v43
    %v211 = vunpack.c.h.b16 %v43
    %v212 = vunpack.c.l.b16 %v44
    %v213 = vunpack.c.h.b16 %v44
    %v214 = vunpack.c.l.b16 %v45
    %v215 = vunpack.c.h.b16 %v45
    %v216 = vunpack.c.l.b16 %v46
    %v217 = vunpack.c.h.b16 %v46
    %v218 = vunpack.c.l.b16 %v47
    %v219 = vunpack.c.h.b16 %v47
    %v220 = vunpack.c.l.b16 %v48
    %v221 = vunpack.c.h.b16 %v48
    %v222 = vunpack.c.l.b16 %v49
    %v223 = vunpack.c.h.b16 %v49
    %v224 = vunpack.c.l.b16 %v50
    %v225 = vunpack.c.h.b16 %v50
    %v226 = vunpack.c.l.b16 %v51
    %v227 = vunpack.c.h.b16 %v51
    %v228 = vunpack.c.l.b16 %v52
    %v229 = vunpack.c.h.b16 %v52
    %v230 = vunpack.c.l.b16 %v53
    %v231 = vunpack.c.h.b16 %v53
    %v232 = vunpack.c.l.b16 %v54
    %v233 = vunpack.c.h.b16 %v54
    %v234 = vunpack.c.l.b16 %v55
    %v235 = vunpack.c.h.b16 %v55
    %v236 = vunpack.c.l.b16 %v56
    %v237 = vunpack.c.h.b16 %v56
    %v238 = vunpack.c.l.b16 %v57
    %v239 = vunpack.c.h.b16 %v57
    %v240 = vunpack.c.l.b16 %v58
    %v241 = vunpack.c.h.b16 %v58
    %v242 = vunpack.c.l.b16 %v59
    %v243 = vunpack.c.h.b16 %v59
    %v244 = vunpack.c.l.b16 %v60
    %v245 = vunpack.c.h.b16 %v60
    %v246 = vunpack.c.l.b16 %v61
    %v247 = vunpack.c.h.b16 %v61
    %v248 = vunpack.c.l.b16 %v62
    %v249 = vunpack.c.h.b16 %v62
    %v250 = vunpack.c.l.b16 %v63
    %v251 = vunpack.c.h.b16 %v63
    %v252 = vunpack.c.l.b16 %v64
    %v253 = vunpack.c.h.b16 %v64
    %v254 = vunpack.c.l.b16 %v65
    %v255 = vunpack.c.h.b16 %v65
    %v256 = vunpack.c.l.b16 %v66
    %v257 = vunpack.c.h.b16 %v66
    %v258 = vunpack.c.l.b16 %v67
    %v259 = vunpack.c.h.b16 %v67
    %v260 = vunpack.c.l.b16 %v68
    %v261 = vunpack.c.h.b16 %v68
    %v262 = vunpack.c.l.b16 %v69
    %v263 = vunpack.c.h.b16 %v69
    %v264 = vunpack.c.l.b16 %v70
    %v265 = vunpack.c.h.b16 %v70
    %v266 = vunpack.c.l.b16 %v71
    %v267 = vunpack.c.h.b16 %v71
    %v268 = vunpack.c.l.b16 %v72
    %v269 = vunpack.c.h.b16 %v72
    %v270 = vunpack.c.l.b16 %v73
    %v271 = vunpack.c.h.b16 %v73
    %v272 = vunpack.c.l.b16 %v74
    %v273 = vunpack.c.h.b16 %v74
    %v274 = vunpack.c.l.b16 %v75
    %v275 = vunpack.c.h.b16 %v75
    %v276 = vunpack.c.l.b16 %v76
    %v277 = vunpack.c.h.b16 %v76
    %v278 = vunpack.c.l.b16 %v77
    %v279 = vunpack.c.h.b16 %v77
    %v280 = vunpack.c.l.b16 %v78
    %v281 = vunpack.c.h.b16 %v78
    %v282 = vunpack.c.l.b16 %v79
    %v283 = vunpack.c.h.b16 %v79
    %v284 = vunpack.c.l.b16 %v80
    %v285 = vunpack.c.h.b16 %v80
    %v286 = vunpack.c.l.b16 %v81
    %v287 = vunpack.c.h.b16 %v81
    %v288 = vunpack.c.l.b16 %v82
    %v289 = vunpack.c.h.b16 %v82
    %v290 = vunpack.c.l.b16 %v83
    %v291 = vunpack.c.h.b16 %v83
    %v292 = vunpack.c.l.b16 %v84
    %v293 = vunpack.c.h.b16 %v84
    %v294 = vunpack.c.l.b16 %v85
    %v295 = vunpack.c.h.b16 %v85
    %v296 = vunpack.c.l.b16 %v86
    %v297 = vunpack.c.h.b16 %v86
    %v298 = vunpack.c.l.b16 %v87
    %v299 = vunpack.c.h.b16 %v87
    %v300 = vunpack.c.l.b16 %v88
    %v301 = vunpack.c.h.b16 %v88
    %v302 = vunpack.c.l.b16 %v89
    %v303 = vunpack.c.h.b16 %v89
    %v304 = vunpack.c.l.b16 %v90
    %v305 = vunpack.c.h.b16 %v90
    %v306 = vunpack.c.l.b16 %v91
    %v307 = vunpack.c.h.b16 %v91
    %v308 = vunpack.c.l.b16 %v92
    %v309 = vunpack.c.h.b16 %v92
    %v310 = vunpack.c.l.b16 %v93
    %v311 = vunpack.c.h.b16 %v93
    %v312 = vunpack.c.l.b16 %v94
    %v313 = vunpack.c.h.b16 %v94
    %v314 = vunpack.c.l.b16 %v95
    %v315 = vunpack.c.h.b16 %v95
    %v316 = vunpack.c.l.b16 %v96
    %v317 = vunpack.c.h.b16 %v96
    %v318 = vpack.c.b16 %v194, %v190
    %v319 = vpack.c.b16 %v195, %v191
    %v320 = vpack.c.b16 %v196, %v192
    %v321 = vpack.c.b16 %v197, %v193
    %v322 = vpack.c.b16 %v202, %v198
    %v323 = vpack.c.b16 %v203, %v199
    %v324 = vpack.c.b16 %v204, %v200
    %v325 = vpack.c.b16 %v205, %v201
    %v326 = vpack.c.b16 %v210, %v206
    %v327 = vpack.c.b16 %v211, %v207
    %v328 = vpack.c.b16 %v212, %v208
    %v329 = vpack.c.b16 %v213, %v209
    %v330 = vpack.c.b16 %v218, %v214
    %v331 = vpack.c.b16 %v219, %v215
    %v332 = vpack.c.b16 %v220, %v216
    %v333 = vpack.c.b16 %v221, %v217
    %v334 = vpack.c.b16 %v226, %v222
    %v335 = vpack.c.b16 %v227, %v223
    %v336 = vpack.c.b16 %v228, %v224
    %v337 = vpack.c.b16 %v229, %v225
    %v338 = vpack.c.b16 %v234, %v230
    %v339 = vpack.c.b16 %v235, %v231
    %v340 = vpack.c.b16 %v236, %v232
    %v341 = vpack.c.b16 %v237, %v233
    %v342 = vpack.c.b16 %v242, %v238
    %v343 = vpack.c.b16 %v243, %v239
    %v344 = vpack.c.b16 %v244, %v240
    %v345 = vpack.c.b16 %v245, %v241
    %v346 = vpack.c.b16 %v250, %v246
    %v347 = vpack.c.b16 %v251, %v247
    %v348 = vpack.c.b16 %v252, %v248
    %v349 = vpack.c.b16 %v253, %v249
    %v350 = vpack.c.b16 %v258, %v254
    %v351 = vpack.c.b16 %v259, %v255
    %v352 = vpack.c.b16 %v260, %v256
    %v353 = vpack.c.b16 %v261, %v257
    %v354 = vpack.c.b16 %v266, %v262
    %v355 = vpack.c.b16 %v267, %v263
    %v356 = vpack.c.b16 %v268, %v264
    %v357 = vpack.c.b16 %v269, %v265
    %v358 = vpack.c.b16 %v274, %v270
    %v359 = vpack.c.b16 %v275, %v271
    %v360 = vpack.c.b16 %v276, %v272
    %v361 = vpack.c.b16 %v277, %v273
    %v362 = vpack.c.b16 %v282, %v278
    %v363 = vpack.c.b16 %v283, %v279
    %v364 = vpack.c.b16 %v284, %v280
    %v365 = vpack.c.b16 %v285, %v281
    %v366 = vpack.c.b16 %v290, %v286
    %v367 = vpack.c.b16 %v291, %v287
    %v368 = vpack.c.b16 %v292, %v288
    %v369 = vpack.c.b16 %v293, %v289
    %v370 = vpack.c.b16 %v298, %v294
    %v371 = vpack.c.b16 %v299, %v295
    %v372 = vpack.c.b16 %v300, %v296
    %v373 = vpack.c.b16 %v301, %v297
    %v374 = vpack.c.b16 %v306, %v302
    %v375 = vpack.c.b16 %v307, %v303
    %v376 = vpack.c.b16 %v308, %v304
    %v377 = vpack.c.b16 %v309, %v305
    %v378 = vpack.c.b16 %v314, %v310
    %v379 = vpack.c.b16 %v315, %v311
    %v380 = vpack.c.b16 %v316, %v312
    %v381 = vpack.c.b16 %v317, %v313
    %446 = vmatprep.subr.bf16.mxu0 %v319
    %447 = vmatpush1.bf16.msra.mxu0 %v318
    %448 = vmatprep.subr.bf16.mxu0 %v323
    %449 = vmatpush1.bf16.msra.mxu0 %v322
    %450 = vmatprep.subr.bf16.mxu0 %v327
    %451 = vmatpush1.bf16.msra.mxu0 %v326
    %452 = vmatprep.subr.bf16.mxu0 %v331
    %453 = vmatpush1.bf16.msra.mxu0 %v330
    %454 = vmatprep.subr.bf16.mxu0 %v335
    %455 = vmatpush1.bf16.msra.mxu0 %v334
    %456 = vmatprep.subr.bf16.mxu0 %v339
    %457 = vmatpush1.bf16.msra.mxu0 %v338
    %458 = vmatprep.subr.bf16.mxu0 %v343
    %459 = vmatpush1.bf16.msra.mxu0 %v342
    %460 = vmatprep.subr.bf16.mxu0 %v347
    %461 = vmatpush1.bf16.msra.mxu0 %v346
    %462 = vmatprep.subr.bf16.mxu0 %v351
    %463 = vmatpush1.bf16.msra.mxu0 %v350
    %464 = vmatprep.subr.bf16.mxu0 %v355
    %465 = vmatpush1.bf16.msra.mxu0 %v354
    %466 = vmatprep.subr.bf16.mxu0 %v359
    %467 = vmatpush1.bf16.msra.mxu0 %v358
    %468 = vmatprep.subr.bf16.mxu0 %v363
    %469 = vmatpush1.bf16.msra.mxu0 %v362
    %470 = vmatprep.subr.bf16.mxu0 %v367
    %471 = vmatpush1.bf16.msra.mxu0 %v366
    %472 = vmatprep.subr.bf16.mxu0 %v371
    %473 = vmatpush1.bf16.msra.mxu0 %v370
    %474 = vmatprep.subr.bf16.mxu0 %v375
    %475 = vmatpush1.bf16.msra.mxu0 %v374
    %476 = vmatprep.subr.bf16.mxu0 %v379
    %477 = vmatpush1.bf16.msra.mxu0 %v378
    %478 = vmatprep.mubr.bf16.mxu0 %v123
    %479 = vmatmul.mubr.bf16.gmra.mrb[0].mxu0 %v122
    %v480 = vpop.f32.mrb[0].mxu0
    %v481 = vadd.f32 %v102, %v480
    %v482 = vpop.f32.mrb[0].mxu0
    %v483 = vadd.f32 %v106, %v482
    %v484 = vpop.f32.mrb[0].mxu0
    %v485 = vpop.f32.mrb[0].mxu0
    %486 = vdwg.mxu0
    %487 = vmatprep.subr.bf16.mxu0 %v321
    %488 = vmatpush1.bf16.msra.mxu0 %v320
    %489 = vmatprep.subr.bf16.mxu0 %v325
    %490 = vmatpush1.bf16.msra.mxu0 %v324
    %491 = vmatprep.subr.bf16.mxu0 %v329
    %492 = vmatpush1.bf16.msra.mxu0 %v328
    %493 = vmatprep.subr.bf16.mxu0 %v333
    %494 = vmatpush1.bf16.msra.mxu0 %v332
    %495 = vmatprep.subr.bf16.mxu0 %v337
    %496 = vmatpush1.bf16.msra.mxu0 %v336
    %497 = vmatprep.subr.bf16.mxu0 %v341
    %498 = vmatpush1.bf16.msra.mxu0 %v340
    %499 = vmatprep.subr.bf16.mxu0 %v345
    %500 = vmatpush1.bf16.msra.mxu0 %v344
    %501 = vmatprep.subr.bf16.mxu0 %v349
    %502 = vmatpush1.bf16.msra.mxu0 %v348
    %503 = vmatprep.subr.bf16.mxu0 %v353
    %504 = vmatpush1.bf16.msra.mxu0 %v352
    %505 = vmatprep.subr.bf16.mxu0 %v357
    %506 = vmatpush1.bf16.msra.mxu0 %v356
    %507 = vmatprep.subr.bf16.mxu0 %v361
    %508 = vmatpush1.bf16.msra.mxu0 %v360
    %509 = vmatprep.subr.bf16.mxu0 %v365
    %510 = vmatpush1.bf16.msra.mxu0 %v364
    %511 = vmatprep.subr.bf16.mxu0 %v369
    %512 = vmatpush1.bf16.msra.mxu0 %v368
    %513 = vmatprep.subr.bf16.mxu0 %v373
    %514 = vmatpush1.bf16.msra.mxu0 %v372
    %515 = vmatprep.subr.bf16.mxu0 %v377
    %516 = vmatpush1.bf16.msra.mxu0 %v376
    %517 = vmatprep.subr.bf16.mxu0 %v381
    %518 = vmatpush1.bf16.msra.mxu0 %v380
    %519 = vmatprep.mubr.bf16.mxu0 %v123
    %520 = vmatmul.mubr.bf16.gmra.mrb[0].mxu0 %v122
    %v521 = vpop.f32.mrb[0].mxu0
    %v522 = vadd.f32 %v110, %v521
    %v523 = vpop.f32.mrb[0].mxu0
    %v524 = vadd.f32 %v114, %v523
    %v525 = vpop.f32.mrb[0].mxu0
    %v526 = vpop.f32.mrb[0].mxu0
    %527 = vdwg.mxu0
    %v528 = vxor.u32 %v522, 2147483648
    %v529 = vmul.f32 %v528, 1.442695
    %v530 = vpow.pop %v529
    %v531 = vadd.f32 %v530, 1.0
    %v532 = vrcp.pop %v531
    %v533 = vmul.f32 1.0, %v532
    %v534 = vmul.f32 %v481, %v533
    %v535 = vxor.u32 %v524, 2147483648
    %v536 = vmul.f32 %v535, 1.442695
    %v537 = vpow.pop %v536
    %v538 = vadd.f32 %v537, 1.0
    %v539 = vrcp.pop %v538
    %v540 = vmul.f32 1.0, %v539
    %v541 = vmul.f32 %v483, %v540
    %v542 = vmul.f32 %v541, 1.442695
    %v543 = vpow.pop %v542
    %v544 = vld [vmem:[%s3] sm:$0xff]
    %v545 = vmul.f32 %v544, %v543
    %v546 = vadd.f32 %v545, %v534
    %547 = vst [vmem:[#allocation5] sm:$0xff] %v546
    // Predicated region
    $region22: #{ca_net_forward.1} parent=1 // pred_check
      _
    $region23: #{ca_net_forward.1} parent=1 // pred_check_branch
      %549 = sbr.rel (0) target = $region25
    $region24: #{ca_net_forward.1} parent=1 // pred_region
      %s551 = ssub.s32 128, 128
      %552 = vsyncadd [#allocation4], %s551
      %s554 = sshll.u32 [#allocation5], 4
      %s555 = int_to_ptr.vmem [resolvable:$true] %s554
      %557 = dma.vmem_to_hbm [thread:$0]  %s555, 128, %s4, [#allocation4]
    $region25: #{ca_net_forward.1} parent=1 // pred_fallthru
      _
    // Predicated region
    $region26: #{ca_net_forward.1} parent=1 // pred_check
      _
    $region27: #{ca_net_forward.1} parent=1 // pred_check_branch
      %559 = sbr.rel (0) target = $region29
    $region28: #{ca_net_forward.1} parent=1 // pred_region
      %560 = dma.done [#allocation4], 128
    $region29: #{ca_net_forward.1} parent=1 // pred_fallthru
      _
    %561 = vsyncpa [#allocation3], 1
    %562 = vsyncpa [#allocation4], 1

</llo_original>
